<compile_context>
chip_gen: v5e
topology: v5e:2x2
jax: 0.10.0
libtpu: 0.0.40
codegen_flags: <defaults>
</compile_context>

<pallas_src>
import jax
import jax.numpy as jnp
from jax.experimental import pallas as pl
from jax.experimental.pallas import tpu as pltpu

EPS = 1e-6          # matches PyTorch module: sqrt(diff*diff + 1e-6)
LANE = 128          # vreg lane width
SUB = 8             # vreg sublane height (f32)
TR_MAX = 512        # max rows per grid step -> 256 KiB / f32 input block


def _make_kernel(tr, rows):
    """Build the per-block kernel (tr, rows are static Python ints)."""
    need_mask = (rows % tr) != 0
    n_sub = tr // SUB

    def kernel(x_ref, y_ref, o_ref):
        # Cast in-register; inputs stay at native dtype in HBM.
        diff = x_ref[...].astype(jnp.float32) - y_ref[...].astype(jnp.float32)
        err = jnp.sqrt(diff * diff + jnp.float32(EPS))

        if need_mask:
            # Only the (possibly) partial last block has invalid rows; the
            # compare+select is free filler in this DMA-bound kernel.
            row = (pl.program_id(0) * tr
                   + jax.lax.broadcasted_iota(jnp.int32, (tr, LANE), 0))
            err = jnp.where(row < rows, err, jnp.float32(0.0))

        # Fold (tr, 128) -> (8, 128) with aligned static slices (pure VPU
        # adds; no XLU reduction inside the loop body).
        part = err[0:SUB, :]
        for k in range(1, n_sub):
            part = part + err[k * SUB:(k + 1) * SUB, :]

        o_ref[0] = part  # this block's (8, 128) partial sum

    return kernel


def charbonnier_loss(X, Y):
    """loss = mean(sqrt((X - Y)^2 + eps)) — exact Charbonnier forward."""
    assert X.shape == Y.shape
    total = X.size

    xf = X.reshape(-1)
    yf = Y.reshape(-1)

    rows = total // LANE          # number of full 128-wide rows
    acc = jnp.float32(0.0)
    main = 0

    if rows >= SUB:
        main = rows * LANE
        # Tile height: multiple of 8, at most TR_MAX, never taller than the
        # array (avoids block_shape > array_shape).
        tr = min(TR_MAX, (rows // SUB) * SUB)
        nblocks = pl.cdiv(rows, tr)

        # Free reshape when total is a multiple of 128 (the common case);
        # otherwise the slice materializes once (still cheaper than the old
        # pad + sqrt(eps) correction path).
        x2 = xf[:main].reshape(rows, LANE)
        y2 = yf[:main].reshape(rows, LANE)

        partials = pl.pallas_call(
            _make_kernel(tr, rows),
            out_shape=jax.ShapeDtypeStruct((nblocks, SUB, LANE), jnp.float32),
            grid=(nblocks,),
            in_specs=[
                pl.BlockSpec((tr, LANE), lambda i: (i, 0)),
                pl.BlockSpec((tr, LANE), lambda i: (i, 0)),
            ],
            out_specs=pl.BlockSpec((1, SUB, LANE), lambda i: (i, 0, 0)),
            compiler_params=pltpu.CompilerParams(
                dimension_semantics=("parallel",)),
        )(x2, y2)

        acc = acc + jnp.sum(partials, dtype=jnp.float32)

    # Lane tail (< 128 elements) and tiny-input fallback in plain JAX.
    if main < total:
        tx = xf[main:].astype(jnp.float32)
        ty = yf[main:].astype(jnp.float32)
        d = tx - ty
        acc = acc + jnp.sum(jnp.sqrt(d * d + jnp.float32(EPS)))

    return acc / jnp.float32(total)


if __name__ == "__main__":
    key = jax.random.PRNGKey(0)
    kx, ky = jax.random.split(key)
    # Small NCHW inputs: batch=2, channels=4, spatial=16x16
    X = jax.random.normal(kx, (2, 4, 16, 16), dtype=jnp.float32)
    Y = jax.random.normal(ky, (2, 4, 16, 16), dtype=jnp.float32)

    loss = jax.block_until_ready(jax.jit(charbonnier_loss)(X, Y))

    # Pure-JAX reference check.
    diff = X - Y
    ref = jnp.mean(jnp.sqrt(diff * diff + EPS))
    assert jnp.allclose(loss, ref, rtol=1e-5, atol=1e-6), (loss, ref)

    print("KERNEL_OK")
</pallas_src>

<mosaic_0001>
module attributes {stable_mosaic.version = 11 : i64} {
  func.func @kernel(%arg0: i32, %arg1: memref<16x128xf32, #tpu.memory_space<vmem>>, %arg2: memref<16x128xf32, #tpu.memory_space<vmem>>, %arg3: memref<1x8x128xf32, #tpu.memory_space<vmem>>) attributes {dimension_semantics = [#tpu.dimension_semantics<parallel>], iteration_bounds = array<i64: 1>, scalar_prefetch = 0 : i64, scratch_operands = 0 : i64, tpu.core_type = #tpu.core_type<tc>, window_params = [{transform_indices = @transform_0, window_bounds = array<i64: 16, 128>}, {transform_indices = @transform_1, window_bounds = array<i64: 16, 128>}, {transform_indices = @transform_2, window_bounds = array<i64: 1, 8, 128>}]} {
    %c0 = arith.constant 0 : index
    %c0_0 = arith.constant 0 : index
    %0 = vector.load %arg1[%c0, %c0_0] : memref<16x128xf32, #tpu.memory_space<vmem>>, vector<16x128xf32>
    %c0_1 = arith.constant 0 : index
    %c0_2 = arith.constant 0 : index
    %1 = vector.load %arg2[%c0_1, %c0_2] : memref<16x128xf32, #tpu.memory_space<vmem>>, vector<16x128xf32>
    %2 = arith.subf %0, %1 : vector<16x128xf32>
    %3 = arith.mulf %2, %2 : vector<16x128xf32>
    %cst = arith.constant 9.99999997E-7 : f32
    %4 = vector.broadcast %cst : f32 to vector<16x128xf32>
    %5 = arith.addf %3, %4 : vector<16x128xf32>
    %6 = math.sqrt %5 : vector<16x128xf32>
    %7 = vector.extract_strided_slice %6 {offsets = [0, 0], sizes = [8, 128], strides = [1, 1]} : vector<16x128xf32> to vector<8x128xf32>
    %8 = vector.extract_strided_slice %6 {offsets = [8, 0], sizes = [8, 128], strides = [1, 1]} : vector<16x128xf32> to vector<8x128xf32>
    %9 = arith.addf %7, %8 : vector<8x128xf32>
    %c0_3 = arith.constant 0 : index
    %c0_4 = arith.constant 0 : index
    %c0_5 = arith.constant 0 : index
    %10 = vector.load %arg3[%c0_3, %c0_4, %c0_5] : memref<1x8x128xf32, #tpu.memory_space<vmem>>, vector<1x8x128xf32>
    %11 = vector.shape_cast %10 : vector<1x8x128xf32> to vector<8x128xf32>
    %12 = vector.shape_cast %9 : vector<8x128xf32> to vector<1x8x128xf32>
    tpu.vector_store %arg3[%c0_3, %c0_4, %c0_5], %12 {strides = array<i32>} : memref<1x8x128xf32, #tpu.memory_space<vmem>>, vector<1x8x128xf32>,
    return
  }
  func.func @transform_0(%arg0: i32) -> (i32, i32) {
    %c0_i32 = arith.constant 0 : i32
    %c0_i32_0 = arith.constant 0 : i32
    return %arg0, %c0_i32 : i32, i32
  }
  func.func @transform_1(%arg0: i32) -> (i32, i32) {
    %c0_i32 = arith.constant 0 : i32
    %c0_i32_0 = arith.constant 0 : i32
    return %arg0, %c0_i32 : i32, i32
  }
  func.func @transform_2(%arg0: i32) -> (i32, i32, i32) {
    %c0_i32 = arith.constant 0 : i32
    %c0_i32_0 = arith.constant 0 : i32
    %c0_i32_1 = arith.constant 0 : i32
    return %arg0, %c0_i32, %c0_i32_0 : i32, i32, i32
  }
}

</mosaic_0001>

<llo_original>
// kernel: charbonnier_loss.1
$region0: #{charbonnier_loss.1}
  #allocation0 [shape = 'u32[]', space=smem, size = 0x4, offset = 0x4, fixed_abs, tag = 'smem constant byte address 0x4 - core index']
  #allocation1 [shape = 'u32[72,128]{1,0:T(1,128)}', space=vmem, size = 0x9000, scoped, tag = 'internal scratch']
  %s0 = inlined_call_operand.vmem [shape: f32[16,128], index: 0, kind: input, shape index: {}]
  %s1 = inlined_call_operand.vmem [shape: f32[16,128], index: 1, kind: input, shape index: {}]
  %s2 = inlined_call_operand.vmem [shape: f32[1,8,128], index: 2, kind: output, shape index: {}]
  %s3 = sld [smem:[#allocation0]]
  $region18: #{charbonnier_loss.1} parent=0
    _
  %s5 = ssub.s32 1, %s3
  %s6 = scalar_select 0, %s5, %s3
  // Predicated region
  $region2: #{charbonnier_loss.1} parent=0 // pred_check
    _
  $region3: #{charbonnier_loss.1} parent=0 // pred_check_branch
    %8 = sbr.rel (0) target = $region5
  $region4: #{charbonnier_loss.1} parent=0 // pred_region
    _
  $region5: #{charbonnier_loss.1} parent=0 // pred_fallthru
    _
  // Predicated region
  $region6: #{charbonnier_loss.1} parent=0 // pred_check
    _
  $region7: #{charbonnier_loss.1} parent=0 // pred_check_branch
    %10 = sbr.rel (0) target = $region9
  $region8: #{charbonnier_loss.1} parent=0 // pred_region
    _
  $region9: #{charbonnier_loss.1} parent=0 // pred_fallthru
    _
  %v11 = vld [vmem:[%s0] sm:$0xff]
  %v12 = vld [vmem:[%s0 + $0x8] sm:$0xff]
  %v13 = vld [vmem:[%s1] sm:$0xff]
  %v14 = vld [vmem:[%s1 + $0x8] sm:$0xff]
  %v15 = vsub.f32 %v11, %v13
  %v16 = vsub.f32 %v12, %v14
  %v17 = vmul.f32 %v15, %v15
  %v18 = vmul.f32 %v16, %v16
  %v19 = vadd.f32 %v17, 1e-06
  %v20 = vadd.f32 %v18, 1e-06
  %v21 = vrsqrt.pop %v19
  %v22 = vmul.f32 %v21, %v19
  %v23 = vmul.f32 %v22, %v21
  %v24 = vmul.f32 0.5, %v23
  %v25 = vsub.f32 1.5, %v24
  %v26 = vmul.f32 %v21, %v25
  %v27 = vmul.f32 %v19, %v26
  %vm28 = vcmp.eq.f32.partialorder %v19, inf
  %v29 = vsel %vm28, %v19, %v27
  %vm30 = vcmp.eq.f32.partialorder %v19, 0.0
  %v31 = vand.u32 %v19, 2147483648
  %v32 = vsel %vm30, %v31, %v29
  %v33 = vrsqrt.pop %v20
  %v34 = vmul.f32 %v33, %v20
  %v35 = vmul.f32 %v34, %v33
  %v36 = vmul.f32 0.5, %v35
  %v37 = vsub.f32 1.5, %v36
  %v38 = vmul.f32 %v33, %v37
  %v39 = vmul.f32 %v20, %v38
  %vm40 = vcmp.eq.f32.partialorder %v20, inf
  %v41 = vsel %vm40, %v20, %v39
  %vm42 = vcmp.eq.f32.partialorder %v20, 0.0
  %v43 = vand.u32 %v20, 2147483648
  %v44 = vsel %vm42, %v43, %v41
  %v45 = vadd.f32 %v32, %v44
  %46 = vst [vmem:[%s2] sm:$0xff] %v45
  // Predicated region
  $region10: #{charbonnier_loss.1} parent=0 // pred_check
    _
  $region11: #{charbonnier_loss.1} parent=0 // pred_check_branch
    %48 = sbr.rel (0) target = $region13
  $region12: #{charbonnier_loss.1} parent=0 // pred_region
    _
  $region13: #{charbonnier_loss.1} parent=0 // pred_fallthru
    _
  // Predicated region
  $region14: #{charbonnier_loss.1} parent=0 // pred_check
    _
  $region15: #{charbonnier_loss.1} parent=0 // pred_check_branch
    %50 = sbr.rel (0) target = $region17
  $region16: #{charbonnier_loss.1} parent=0 // pred_region
    _
  $region17: #{charbonnier_loss.1} parent=0 // pred_fallthru
    _

</llo_original>
